<compile_context>
chip_gen: v7x
topology: tpu7x:2x2x1
jax: 0.10.0
libtpu: 0.0.40
codegen_flags: <defaults>
</compile_context>

<pallas_src>
import jax
import jax.numpy as jnp
from jax import lax
from jax.experimental import pallas as pl
from jax.experimental.pallas import tpu as pltpu


# --------------------------------------------------------------------------
# helpers
# --------------------------------------------------------------------------
def _round_up(x: int, m: int) -> int:
    return ((x + m - 1) // m) * m


def _sublane_unit(dtype) -> int:
    """Minimum sublane granularity for a dtype ((8,128) f32, (16,128) bf16,
    (32,128) for 8-bit types)."""
    itemsize = jnp.dtype(dtype).itemsize
    if itemsize >= 4:
        return 8
    if itemsize == 2:
        return 16
    return 32


def _select_vocab_k_tiles(d_vocab: int, d_model: int, tn=None, tk=None):
    """Pick hardware-friendly vocab/reduction tiles first, then pad up to them."""
    if tn is None:
        v256 = _round_up(d_vocab, 256)           # 256-aligned for the 2x256 MXU
        tn = v256 if v256 <= 1024 else 1024      # lane-dense, unmasked stores
    else:
        assert tn % 128 == 0, "tn must be a multiple of 128 (lane width)"
    V_pad = _round_up(d_vocab, tn)

    if tk is None:
        k128 = _round_up(d_model, 128)
        tk = k128 if k128 <= 1024 else 512       # single K step for d_model<=1024
    else:
        assert tk % 128 == 0, "tk must be a multiple of 128 (lane width)"
    K_pad = _round_up(d_model, tk)
    return tn, V_pad, tk, K_pad


# --------------------------------------------------------------------------
# kernels
# --------------------------------------------------------------------------
def _unembed_kernel_single_k(x_ref, w_ref, b_ref, o_ref):
    """Single reduction step: d_model fits in one tk tile.  No scratch."""
    acc = lax.dot_general(
        x_ref[...],                      # (tm, tk)
        w_ref[...],                      # (tn, tk) — native [d_vocab, d_model]
        dimension_numbers=(((1,), (1,)), ((), ())),
        preferred_element_type=jnp.float32,
    )
    o_ref[...] = (acc + b_ref[...]).astype(o_ref.dtype)


def _unembed_kernel_multi_k(x_ref, w_ref, b_ref, o_ref, acc_ref):
    """General case: grid axis 2 reduces over d_model with an f32 accumulator."""
    k = pl.program_id(2)

    @pl.when(k == 0)
    def _():
        acc_ref[...] = jnp.zeros_like(acc_ref)

    acc_ref[...] += lax.dot_general(
        x_ref[...],
        w_ref[...],
        dimension_numbers=(((1,), (1,)), ((), ())),
        preferred_element_type=jnp.float32,
    )

    @pl.when(k == pl.num_programs(2) - 1)
    def _():
        o_ref[...] = (acc_ref[...] + b_ref[...]).astype(o_ref.dtype)


# --------------------------------------------------------------------------
# parameter preparation (hoisted out of the hot path — do this once)
# --------------------------------------------------------------------------
def prepare_unembed_params(W_U, b_U, *, compute_dtype=jnp.bfloat16,
                           tn=None, tk=None):
    """Cast + zero-pad the weight/bias once, at parameter-setup time.

    Returns a dict consumed by unembed_apply().  Doing this per-call would
    re-materialize the full (possibly ~100-200 MB) weight in HBM every step.
    """
    d_vocab, d_model = W_U.shape
    assert b_U.shape == (d_vocab,)
    tn, V_pad, tk, K_pad = _select_vocab_k_tiles(d_vocab, d_model, tn, tk)

    if compute_dtype is not None:
        W_U = W_U.astype(compute_dtype)
    if (V_pad, K_pad) != (d_vocab, d_model):
        W_U = jnp.pad(W_U, ((0, V_pad - d_vocab), (0, K_pad - d_model)))

    b = b_U.astype(jnp.float32).reshape(1, d_vocab)
    if V_pad != d_vocab:
        b = jnp.pad(b, ((0, 0), (0, V_pad - d_vocab)))

    return dict(W=W_U, b=b, d_vocab=d_vocab, d_model=d_model,
                tn=tn, tk=tk, V_pad=V_pad, K_pad=K_pad,
                compute_dtype=compute_dtype)


# --------------------------------------------------------------------------
# hot path
# --------------------------------------------------------------------------
def unembed_apply(tokens, params, *, tm=None, out_dtype=None,
                  weight_buffering=None,
                  vmem_limit_bytes=48 * 1024 * 1024):
    """tokens: [B, P, d_model] -> logits [B, P, d_vocab]."""
    B, P, d_model = tokens.shape
    assert d_model == params["d_model"], "tokens/W_U d_model mismatch"

    W = params["W"]
    b = params["b"]
    tn, tk = params["tn"], params["tk"]
    V_pad, K_pad = params["V_pad"], params["K_pad"]
    d_vocab = params["d_vocab"]
    compute_dtype = params["compute_dtype"]

    out_dtype = out_dtype if out_dtype is not None else tokens.dtype
    if compute_dtype is not None:
        tokens = tokens.astype(compute_dtype)

    M = B * P
    x = tokens.reshape(M, d_model)

    # ---- M tile: dtype-aware sublane unit, cap 512, full-M tile when small ----
    unit = _sublane_unit(x.dtype)
    if tm is None:
        m_u = _round_up(M, unit)
        if m_u <= 512:
            tm = m_u                      # one i tile: W_U streamed exactly once
        else:
            tm = 512                      # halves the weight re-stream vs 256
    else:
        assert tm % unit == 0, f"tm must be a multiple of {unit} for {x.dtype}"
    M_pad = _round_up(M, tm)

    # Cheap activation pad only (the weight is pre-padded).
    if (M_pad, K_pad) != (M, d_model):
        x = jnp.pad(x, ((0, M_pad - M), (0, K_pad - d_model)))

    single_k = (K_pad == tk)
    out_shape = jax.ShapeDtypeStruct((M_pad, V_pad), out_dtype)

    flops = 2 * M_pad * V_pad * K_pad
    bytes_accessed = (x.size * x.dtype.itemsize + W.size * W.dtype.itemsize
                      + b.size * 4 + M_pad * V_pad * jnp.dtype(out_dtype).itemsize)
    cost = pl.CostEstimate(flops=flops, transcendentals=0,
                           bytes_accessed=bytes_accessed)

    w_spec_kwargs = {}
    if weight_buffering is not None:
        # Deeper weight buffering for the decode DMA-bubble case.
        w_spec_kwargs["pipeline_mode"] = pl.Buffered(weight_buffering)

    if single_k:
        grid = (M_pad // tm, V_pad // tn)
        out = pl.pallas_call(
            _unembed_kernel_single_k,
            out_shape=out_shape,
            grid_spec=pltpu.PrefetchScalarGridSpec(
                num_scalar_prefetch=0,
                grid=grid,
                in_specs=[
                    pl.BlockSpec((tm, tk), lambda i, j: (i, 0)),
                    pl.BlockSpec((tn, tk), lambda i, j: (j, 0), **w_spec_kwargs),
                    pl.BlockSpec((1, tn), lambda i, j: (0, j)),
                ],
                out_specs=pl.BlockSpec((tm, tn), lambda i, j: (i, j)),
            ),
            compiler_params=pltpu.CompilerParams(
                dimension_semantics=("parallel", "parallel"),
                vmem_limit_bytes=vmem_limit_bytes,
            ),
            cost_estimate=cost,
        )(x, W, b)
    else:
        grid = (M_pad // tm, V_pad // tn, K_pad // tk)
        out = pl.pallas_call(
            _unembed_kernel_multi_k,
            out_shape=out_shape,
            grid_spec=pltpu.PrefetchScalarGridSpec(
                num_scalar_prefetch=0,
                grid=grid,
                in_specs=[
                    pl.BlockSpec((tm, tk), lambda i, j, k: (i, k)),
                    pl.BlockSpec((tn, tk), lambda i, j, k: (j, k), **w_spec_kwargs),
                    # bias block index independent of k -> fetched once per (i,j)
                    pl.BlockSpec((1, tn), lambda i, j, k: (0, j)),
                ],
                out_specs=pl.BlockSpec((tm, tn), lambda i, j, k: (i, j)),
                scratch_shapes=[pltpu.VMEM((tm, tn), jnp.float32)],
            ),
            compiler_params=pltpu.CompilerParams(
                dimension_semantics=("parallel", "parallel", "arbitrary"),
                vmem_limit_bytes=vmem_limit_bytes,
            ),
            cost_estimate=cost,
        )(x, W, b)

    # TODO(synk): for prefill-scale outputs, prefer keeping the padded vocab
    # dim end-to-end (mask padded logits downstream) to avoid this slice copy.
    if (M_pad, V_pad) != (M, d_vocab):
        out = out[:M, :d_vocab]
    return out.reshape(B, P, d_vocab)


def unembed(tokens, W_U, b_U, *, compute_dtype=jnp.bfloat16,
            tm=None, tn=None, tk=None, weight_buffering=None,
            vmem_limit_bytes=48 * 1024 * 1024):
    """Convenience wrapper (prepares the weight per call).  For production,
    call prepare_unembed_params() once and reuse it with unembed_apply()."""
    params = prepare_unembed_params(W_U, b_U, compute_dtype=compute_dtype,
                                    tn=tn, tk=tk)
    return unembed_apply(tokens, params, tm=tm,
                         out_dtype=tokens.dtype,
                         weight_buffering=weight_buffering,
                         vmem_limit_bytes=vmem_limit_bytes)


# --------------------------------------------------------------------------
# tests
# --------------------------------------------------------------------------
if __name__ == "__main__":
    key = jax.random.PRNGKey(0)
    k1, k2, k3, k4, k5, k6, k7, k8, k9 = jax.random.split(key, 9)

    # --- primary small config: batch=2, pos=8, d_model=128, d_vocab=256 ---
    B, P, D_MODEL, D_VOCAB = 2, 8, 128, 256
    W_U = jax.random.normal(k1, (D_VOCAB, D_MODEL), dtype=jnp.float32) * 0.02
    b_U = jax.random.normal(k2, (D_VOCAB,), dtype=jnp.float32) * 0.01
    tokens = jax.random.normal(k3, (B, P, D_MODEL), dtype=jnp.float32)
    ref = jnp.einsum("vm,bpm->bpv", W_U, tokens) + b_U

    # f32 path (tight tolerance); weight prep hoisted and reused.
    params_f32 = prepare_unembed_params(W_U, b_U, compute_dtype=jnp.float32)
    out = jax.block_until_ready(unembed_apply(tokens, params_f32))
    assert out.shape == (B, P, D_VOCAB)
    assert jnp.allclose(out, ref, atol=1e-4, rtol=1e-4)
    out_again = jax.block_until_ready(unembed_apply(tokens, params_f32))
    assert jnp.allclose(out_again, ref, atol=1e-4, rtol=1e-4)

    # default bf16 weight/activation stream, f32 accumulate (loose tolerance).
    out_bf16 = jax.block_until_ready(unembed(tokens, W_U, b_U))
    assert out_bf16.shape == (B, P, D_VOCAB)
    assert jnp.allclose(out_bf16, ref, atol=3e-2, rtol=3e-2)

    # --- ragged config: exercises the pad / slice-back path (f32) ---
    B2, P2, D_MODEL2, D_VOCAB2 = 2, 5, 96, 1000
    W_U2 = jax.random.normal(k4, (D_VOCAB2, D_MODEL2), dtype=jnp.float32) * 0.02
    b_U2 = jax.random.normal(k5, (D_VOCAB2,), dtype=jnp.float32) * 0.01
    tokens2 = jax.random.normal(k6, (B2, P2, D_MODEL2), dtype=jnp.float32)
    out2 = jax.block_until_ready(
        unembed(tokens2, W_U2, b_U2, compute_dtype=jnp.float32))
    ref2 = jnp.einsum("vm,bpm->bpv", W_U2, tokens2) + b_U2
    assert out2.shape == (B2, P2, D_VOCAB2)
    assert jnp.allclose(out2, ref2, atol=1e-4, rtol=1e-4)

    # --- multi-K reduction path (explicit small tk forces >1 reduction step) ---
    B3, P3, D_MODEL3, D_VOCAB3 = 2, 8, 256, 512
    W_U3 = jax.random.normal(k7, (D_VOCAB3, D_MODEL3), dtype=jnp.float32) * 0.02
    b_U3 = jax.random.normal(k8, (D_VOCAB3,), dtype=jnp.float32) * 0.01
    tokens3 = jax.random.normal(k9, (B3, P3, D_MODEL3), dtype=jnp.float32)
    out3 = jax.block_until_ready(
        unembed(tokens3, W_U3, b_U3, compute_dtype=jnp.float32, tk=128))
    ref3 = jnp.einsum("vm,bpm->bpv", W_U3, tokens3) + b_U3
    assert out3.shape == (B3, P3, D_VOCAB3)
    assert jnp.allclose(out3, ref3, atol=1e-4, rtol=1e-4)

    print("KERNEL_OK")
</pallas_src>

<mosaic_0001>
module attributes {stable_mosaic.version = 11 : i64} {
  func.func @_unembed_kernel_single_k(%arg0: i32, %arg1: i32, %arg2: memref<16x128xf32, #tpu.memory_space<vmem>>, %arg3: memref<256x128xf32, #tpu.memory_space<vmem>>, %arg4: memref<1x256xf32, #tpu.memory_space<vmem>>, %arg5: memref<16x256xf32, #tpu.memory_space<vmem>>) attributes {dimension_semantics = [#tpu.dimension_semantics<parallel>, #tpu.dimension_semantics<parallel>], iteration_bounds = array<i64: 1, 1>, scalar_prefetch = 0 : i64, scratch_operands = 0 : i64, tpu.core_type = #tpu.core_type<tc>, window_params = [{transform_indices = @transform_0, window_bounds = array<i64: 16, 128>}, {transform_indices = @transform_1, window_bounds = array<i64: 256, 128>}, {transform_indices = @transform_2, window_bounds = array<i64: 1, 256>}, {transform_indices = @transform_3, window_bounds = array<i64: 16, 256>}]} {
    %c0 = arith.constant 0 : index
    %c0_0 = arith.constant 0 : index
    %0 = vector.load %arg2[%c0, %c0_0] : memref<16x128xf32, #tpu.memory_space<vmem>>, vector<16x128xf32>
    %c0_1 = arith.constant 0 : index
    %c0_2 = arith.constant 0 : index
    %1 = vector.load %arg3[%c0_1, %c0_2] : memref<256x128xf32, #tpu.memory_space<vmem>>, vector<256x128xf32>
    %cst = arith.constant dense<0.000000e+00> : vector<16x256xf32>
    %2 = tpu.matmul %0, %1, %cst {dimension_numbers = #tpu.dot_dimension_numbers<[1], [1], [0], [0], [0, 0, 1, 0], [], []>} : vector<16x128xf32>, vector<256x128xf32>, vector<16x256xf32> -> vector<16x256xf32>
    %c0_3 = arith.constant 0 : index
    %c0_4 = arith.constant 0 : index
    %3 = vector.load %arg4[%c0_3, %c0_4] : memref<1x256xf32, #tpu.memory_space<vmem>>, vector<1x256xf32>
    %4 = vector.broadcast %3 : vector<1x256xf32> to vector<16x256xf32>
    %5 = arith.addf %2, %4 : vector<16x256xf32>
    %c0_5 = arith.constant 0 : index
    %c0_6 = arith.constant 0 : index
    %6 = vector.load %arg5[%c0_5, %c0_6] : memref<16x256xf32, #tpu.memory_space<vmem>>, vector<16x256xf32>
    tpu.vector_store %arg5[%c0_5, %c0_6], %5 {strides = array<i32>} : memref<16x256xf32, #tpu.memory_space<vmem>>, vector<16x256xf32>,
    return
  }
  func.func @transform_0(%arg0: i32, %arg1: i32) -> (i32, i32) {
    %c0_i32 = arith.constant 0 : i32
    %c0_i32_0 = arith.constant 0 : i32
    return %arg0, %c0_i32 : i32, i32
  }
  func.func @transform_1(%arg0: i32, %arg1: i32) -> (i32, i32) {
    %c0_i32 = arith.constant 0 : i32
    %c0_i32_0 = arith.constant 0 : i32
    return %arg1, %c0_i32 : i32, i32
  }
  func.func @transform_2(%arg0: i32, %arg1: i32) -> (i32, i32) {
    %c0_i32 = arith.constant 0 : i32
    %c0_i32_0 = arith.constant 0 : i32
    return %c0_i32, %arg1 : i32, i32
  }
  func.func @transform_3(%arg0: i32, %arg1: i32) -> (i32, i32) {
    %c0_i32 = arith.constant 0 : i32
    return %arg0, %arg1 : i32, i32
  }
}

</mosaic_0001>

<llo_original>
// kernel: tpu_custom_call.1
$region0: #{tpu_custom_call.1}
  #allocation0 [shape = 'u32[]', space=smem, size = 0x4, offset = 0x4, fixed_abs, tag = 'smem constant byte address 0x4 - core index']
  #allocation1 [shape = 'u32[144,128]{1,0:T(1,128)}', space=vmem, size = 0x12000, scoped, tag = 'internal scratch']
  %s0 = inlined_call_operand.hbm [shape: f32[16,128], index: 0, kind: input, shape index: {}]
  %s1 = inlined_call_operand.hbm [shape: f32[256,128], index: 1, kind: input, shape index: {}]
  %s2 = inlined_call_operand.vmem [shape: f32[1,256], index: 2, kind: input, shape index: {}]
  %s3 = inlined_call_operand.hbm [shape: f32[16,256], index: 3, kind: output, shape index: {}]
  %s4 = sld [smem:[#allocation0]]
  $region30: #{tpu_custom_call.1} parent=0
    _
  %s6 = ssub.s32 1, %s4
  %s7 = scalar_select 0, %s6, %s4
  $region1: #{tpu_custom_call.1} parent=0
    #allocation2 [shape = 'u8[8192]{0}', space=vmem, size = 0x2000, scoped, tag = 'input window, operand 0, single buffered']
    #allocation3 [shape = 's32[1]{0}', space=sflag, size = 0x4, scoped, tag = 'scoped memory for tpu_custom_call.1']
    #allocation4 [shape = 's32[1]{0}', space=sflag, size = 0x4, scoped, tag = 'scoped memory for tpu_custom_call.1']
    #allocation5 [shape = 'u8[131072]{0}', space=vmem, size = 0x20000, scoped, tag = 'input window, operand 1, single buffered']
    #allocation6 [shape = 's32[1]{0}', space=sflag, size = 0x4, scoped, tag = 'scoped memory for tpu_custom_call.1']
    #allocation7 [shape = 'u8[16384]{0}', space=vmem, size = 0x4000, scoped, tag = 'output window, operand 0, single buffered']
    %8 = vsyncpa [#allocation3], 0
    %9 = vsyncpa [#allocation6], 0
    %10 = vsyncpa [#allocation4], 0
    // Predicated region
    $region2: #{tpu_custom_call.1} parent=1 // pred_check
      _
    $region3: #{tpu_custom_call.1} parent=1 // pred_check_branch
      %12 = sbr.rel (0) target = $region5
    $region4: #{tpu_custom_call.1} parent=1 // pred_region
      %s14 = ssub.s32 256, 256
      %15 = vsyncadd [#allocation3], %s14
      %s16 = sshll.u32 [#allocation2], 4
      %s17 = int_to_ptr.vmem [resolvable:$true] %s16
      %22 = dma.hbm_to_vmem [thread:$0]  %s0, 256, %s17, [#allocation3], 128, 128, 8
    $region5: #{tpu_custom_call.1} parent=1 // pred_fallthru
      _
    // Predicated region
    $region6: #{tpu_custom_call.1} parent=1 // pred_check
      _
    $region7: #{tpu_custom_call.1} parent=1 // pred_check_branch
      %24 = sbr.rel (0) target = $region9
    $region8: #{tpu_custom_call.1} parent=1 // pred_region
      %s26 = ssub.s32 4096, 4096
      %27 = vsyncadd [#allocation6], %s26
      %s28 = sshll.u32 [#allocation5], 4
      %s29 = int_to_ptr.vmem [resolvable:$true] %s28
      %34 = dma.hbm_to_vmem [thread:$0]  %s1, 4096, %s29, [#allocation6], 128, 128, 8
    $region9: #{tpu_custom_call.1} parent=1 // pred_fallthru
      _
    // Predicated region
    $region10: #{tpu_custom_call.1} parent=1 // pred_check
      _
    $region11: #{tpu_custom_call.1} parent=1 // pred_check_branch
      %36 = sbr.rel (0) target = $region13
    $region12: #{tpu_custom_call.1} parent=1 // pred_region
      _
    $region13: #{tpu_custom_call.1} parent=1 // pred_fallthru
      _
    // Predicated region
    $region14: #{tpu_custom_call.1} parent=1 // pred_check
      _
    $region15: #{tpu_custom_call.1} parent=1 // pred_check_branch
      %38 = sbr.rel (0) target = $region17
    $region16: #{tpu_custom_call.1} parent=1 // pred_region
      %39 = dma.done [#allocation3], 256
    $region17: #{tpu_custom_call.1} parent=1 // pred_fallthru
      _
    // Predicated region
    $region18: #{tpu_custom_call.1} parent=1 // pred_check
      _
    $region19: #{tpu_custom_call.1} parent=1 // pred_check_branch
      %41 = sbr.rel (0) target = $region21
    $region20: #{tpu_custom_call.1} parent=1 // pred_region
      %42 = dma.done [#allocation6], 4096
    $region21: #{tpu_custom_call.1} parent=1 // pred_fallthru
      _
    %v43 = vld [vmem:[#allocation2] sm:$0xff]
    %v44 = vld [vmem:[#allocation2 + $0x8] sm:$0xff]
    %v45 = vld [vmem:[#allocation5] sm:$0xff]
    %v46 = vld [vmem:[#allocation5 + $0x8] sm:$0xff]
    %v47 = vld [vmem:[#allocation5 + $0x10] sm:$0xff]
    %v48 = vld [vmem:[#allocation5 + $0x18] sm:$0xff]
    %v49 = vld [vmem:[#allocation5 + $0x20] sm:$0xff]
    %v50 = vld [vmem:[#allocation5 + $0x28] sm:$0xff]
    %v51 = vld [vmem:[#allocation5 + $0x30] sm:$0xff]
    %v52 = vld [vmem:[#allocation5 + $0x38] sm:$0xff]
    %v53 = vld [vmem:[#allocation5 + $0x40] sm:$0xff]
    %v54 = vld [vmem:[#allocation5 + $0x48] sm:$0xff]
    %v55 = vld [vmem:[#allocation5 + $0x50] sm:$0xff]
    %v56 = vld [vmem:[#allocation5 + $0x58] sm:$0xff]
    %v57 = vld [vmem:[#allocation5 + $0x60] sm:$0xff]
    %v58 = vld [vmem:[#allocation5 + $0x68] sm:$0xff]
    %v59 = vld [vmem:[#allocation5 + $0x70] sm:$0xff]
    %v60 = vld [vmem:[#allocation5 + $0x78] sm:$0xff]
    %v61 = vld [vmem:[#allocation5 + $0x80] sm:$0xff]
    %v62 = vld [vmem:[#allocation5 + $0x88] sm:$0xff]
    %v63 = vld [vmem:[#allocation5 + $0x90] sm:$0xff]
    %v64 = vld [vmem:[#allocation5 + $0x98] sm:$0xff]
    %v65 = vld [vmem:[#allocation5 + $0xa0] sm:$0xff]
    %v66 = vld [vmem:[#allocation5 + $0xa8] sm:$0xff]
    %v67 = vld [vmem:[#allocation5 + $0xb0] sm:$0xff]
    %v68 = vld [vmem:[#allocation5 + $0xb8] sm:$0xff]
    %v69 = vld [vmem:[#allocation5 + $0xc0] sm:$0xff]
    %v70 = vld [vmem:[#allocation5 + $0xc8] sm:$0xff]
    %v71 = vld [vmem:[#allocation5 + $0xd0] sm:$0xff]
    %v72 = vld [vmem:[#allocation5 + $0xd8] sm:$0xff]
    %v73 = vld [vmem:[#allocation5 + $0xe0] sm:$0xff]
    %v74 = vld [vmem:[#allocation5 + $0xe8] sm:$0xff]
    %v75 = vld [vmem:[#allocation5 + $0xf0] sm:$0xff]
    %v76 = vld [vmem:[#allocation5 + $0xf8] sm:$0xff]
    %v77 = vld [vmem:[%s2] sm:$0x3]
    %v79 = vlaneseq
    %v80 = vshrl.u32 %v79, 7
    %v81 = vsub.s32 0, %v80
    %v82 = vrot.slane %v77, %v81
    %v83 = vlaneseq
    %v84 = vshrl.u32 %v83, 7
    %v85 = vsub.s32 1, %v84
    %v86 = vrot.slane %v77, %v85
    %89 = vmatprep.subr.mxu0 0.0
    %90 = vmatpush1.xpose.msra.mxu0 %v45
    %91 = vmatprep.subr.mxu0 0.0
    %92 = vmatpush1.xpose.msra.mxu0 %v46
    %93 = vmatprep.subr.mxu0 0.0
    %94 = vmatpush1.xpose.msra.mxu0 %v47
    %95 = vmatprep.subr.mxu0 0.0
    %96 = vmatpush1.xpose.msra.mxu0 %v48
    %97 = vmatprep.subr.mxu0 0.0
    %98 = vmatpush1.xpose.msra.mxu0 %v49
    %99 = vmatprep.subr.mxu0 0.0
    %100 = vmatpush1.xpose.msra.mxu0 %v50
    %101 = vmatprep.subr.mxu0 0.0
    %102 = vmatpush1.xpose.msra.mxu0 %v51
    %103 = vmatprep.subr.mxu0 0.0
    %104 = vmatpush1.xpose.msra.mxu0 %v52
    %105 = vmatprep.subr.mxu0 0.0
    %106 = vmatpush1.xpose.msra.mxu0 %v53
    %107 = vmatprep.subr.mxu0 0.0
    %108 = vmatpush1.xpose.msra.mxu0 %v54
    %109 = vmatprep.subr.mxu0 0.0
    %110 = vmatpush1.xpose.msra.mxu0 %v55
    %111 = vmatprep.subr.mxu0 0.0
    %112 = vmatpush1.xpose.msra.mxu0 %v56
    %113 = vmatprep.subr.mxu0 0.0
    %114 = vmatpush1.xpose.msra.mxu0 %v57
    %115 = vmatprep.subr.mxu0 0.0
    %116 = vmatpush1.xpose.msra.mxu0 %v58
    %117 = vmatprep.subr.mxu0 0.0
    %118 = vmatpush1.xpose.msra.mxu0 %v59
    %119 = vmatprep.subr.mxu0 0.0
    %120 = vmatpush1.xpose.msra.mxu0 %v60
    %121 = vmatprep.subr.mxu0 0.0
    %122 = vmatpush1.xpose.msra.mxu0 %v61
    %123 = vmatprep.subr.mxu0 0.0
    %124 = vmatpush1.xpose.msra.mxu0 %v62
    %125 = vmatprep.subr.mxu0 0.0
    %126 = vmatpush1.xpose.msra.mxu0 %v63
    %127 = vmatprep.subr.mxu0 0.0
    %128 = vmatpush1.xpose.msra.mxu0 %v64
    %129 = vmatprep.subr.mxu0 0.0
    %130 = vmatpush1.xpose.msra.mxu0 %v65
    %131 = vmatprep.subr.mxu0 0.0
    %132 = vmatpush1.xpose.msra.mxu0 %v66
    %133 = vmatprep.subr.mxu0 0.0
    %134 = vmatpush1.xpose.msra.mxu0 %v67
    %135 = vmatprep.subr.mxu0 0.0
    %136 = vmatpush1.xpose.msra.mxu0 %v68
    %137 = vmatprep.subr.mxu0 0.0
    %138 = vmatpush1.xpose.msra.mxu0 %v69
    %139 = vmatprep.subr.mxu0 0.0
    %140 = vmatpush1.xpose.msra.mxu0 %v70
    %141 = vmatprep.subr.mxu0 0.0
    %142 = vmatpush1.xpose.msra.mxu0 %v71
    %143 = vmatprep.subr.mxu0 0.0
    %144 = vmatpush1.xpose.msra.mxu0 %v72
    %145 = vmatprep.subr.mxu0 0.0
    %146 = vmatpush1.xpose.msra.mxu0 %v73
    %147 = vmatprep.subr.mxu0 0.0
    %148 = vmatpush1.xpose.msra.mxu0 %v74
    %149 = vmatprep.subr.mxu0 0.0
    %150 = vmatpush1.xpose.msra.mxu0 %v75
    %151 = vmatprep.subr.mxu0 0.0
    %152 = vmatpush1.xpose.msra.mxu0 %v76
    %153 = vmatprep.mubr.f32.mxu0 0.0
    %154 = vmatmul.mubr.f32.gmra.mrb[0].mxu0 %v43
    %v155 = vpop.f32.mrb[0].mxu0
    %v156 = vadd.f32 %v82, %v155
    %v157 = vpop.f32.mrb[0].mxu0
    %v158 = vadd.f32 %v86, %v157
    %159 = vmatprep.mubr.f32.mxu0 0.0
    %160 = vmatmul.mubr.f32.gmra.mrb[0].mxu0 %v44
    %v161 = vpop.f32.mrb[0].mxu0
    %v162 = vadd.f32 %v82, %v161
    %v163 = vpop.f32.mrb[0].mxu0
    %v164 = vadd.f32 %v86, %v163
    %165 = vdwg.mxu0
    %166 = vst [vmem:[#allocation7] sm:$0xff] %v156
    %167 = vst [vmem:[#allocation7 + $0x8] sm:$0xff] %v158
    %168 = vst [vmem:[#allocation7 + $0x10] sm:$0xff] %v162
    %169 = vst [vmem:[#allocation7 + $0x18] sm:$0xff] %v164
    // Predicated region
    $region22: #{tpu_custom_call.1} parent=1 // pred_check
      _
    $region23: #{tpu_custom_call.1} parent=1 // pred_check_branch
      %171 = sbr.rel (0) target = $region25
    $region24: #{tpu_custom_call.1} parent=1 // pred_region
      %s173 = ssub.s32 512, 512
      %174 = vsyncadd [#allocation4], %s173
      %s175 = sshll.u32 [#allocation7], 4
      %s176 = int_to_ptr.vmem [resolvable:$true] %s175
      %181 = dma.vmem_to_hbm [thread:$0]  %s176, 512, %s3, [#allocation4], 256, 256, 16
    $region25: #{tpu_custom_call.1} parent=1 // pred_fallthru
      _
    // Predicated region
    $region26: #{tpu_custom_call.1} parent=1 // pred_check
      _
    $region27: #{tpu_custom_call.1} parent=1 // pred_check_branch
      %183 = sbr.rel (0) target = $region29
    $region28: #{tpu_custom_call.1} parent=1 // pred_region
      %184 = dma.done [#allocation4], 512
    $region29: #{tpu_custom_call.1} parent=1 // pred_fallthru
      _
    %185 = vsyncpa [#allocation3], 1
    %186 = vsyncpa [#allocation6], 1
    %187 = vsyncpa [#allocation4], 1

</llo_original>
